<compile_context>
chip_gen: v6e
topology: v6e:2x2x1
jax: 0.10.0
libtpu: 0.0.40
codegen_flags: <defaults>
</compile_context>

<pallas_src>
import functools
import math

import numpy as np
import jax
import jax.numpy as jnp
from jax.experimental import pallas as pl
from jax.experimental.pallas import tpu as pltpu

# Constants mirroring the PyTorch module defaults (synthetic, no checkpoint).
SMOOTHING_PROB = 0.1
PADDING_IDX = 0
VOCAB_SIZE = 16

_MAX_OUT_BLOCK_BYTES = 8 * 1024 * 1024   # per-buffer f32 output block budget
_MAX_EXPAND_BYTES = 2 * 1024 * 1024      # cap on the resident expansion matrix
_VMEM_LIMIT_BYTES = 48 * 1024 * 1024     # fits v7x (64 MiB) and v5e/v6e (128 MiB)


def _label_smoothing_kernel(*refs, confidence, padding_f, mode):
    """refs = (targets, vocab_id, smooth_pattern, [expand | lane_tok], out).

    targets:        (tR, row_tokens) int32   -- this block's target ids
    vocab_id:       (1, C) float32           -- (lane % V), precomputed
    smooth_pattern: (1, C) float32           -- base smoothing, 0 at pad column
    expand:         (row_tokens, C) float32  -- 0/1 token->lane matrix (matmul mode)
    lane_tok:       (1, C) int32             -- (lane // V), chain mode only
    out:            (tR, C) float32
    """
    tgt_ref, vocab_ref, smooth_ref = refs[0], refs[1], refs[2]
    out_ref = refs[-1]

    t = tgt_ref[...].astype(jnp.float32)            # (tR, row_tokens), tiny
    vocab_id = vocab_ref[...]                       # (1, C)
    smooth = smooth_ref[...]                        # (1, C)

    # Replicate each token's target id across its V output lanes:
    #   t_rep[r, c] = targets[r, c // V]
    if mode == "broadcast":
        # row_tokens == 1: the compares below lane-broadcast (tR, 1) directly.
        t_rep = t
    elif mode == "matmul":
        # Small vocab, large blocks: replicate on the (otherwise idle) MXU via
        # the constant 0/1 expansion matrix.  Only taken when vocab_size < 128,
        # so every id is exactly representable in bf16 and the result is
        # bit-exact at default matmul precision (exact equality below is safe).
        expand = refs[3][...]                        # (row_tokens, C)
        t_rep = jnp.dot(t, expand, preferred_element_type=jnp.float32)
    else:  # "chain": tiny (unit-test sized) blocks; short lane-select chain.
        lane_tok = refs[3][...]                      # (1, C) int32
        row_tokens = tgt_ref.shape[1]
        t_rep = jnp.zeros((tgt_ref.shape[0], out_ref.shape[1]), jnp.float32)
        for j in range(row_tokens):
            t_rep = jnp.where(lane_tok == j, t[:, j:j + 1], t_rep)

    # 4 full-block VPU ops per output vreg: cmp, select, cmp, select.
    # The padding column is already zero inside smooth_pattern; rows whose
    # target is the padding token are zeroed by the final select.
    probs = jnp.where(vocab_id == t_rep, confidence, smooth)
    out_ref[...] = jnp.where(t_rep == padding_f, jnp.float32(0.0), probs)


def _choose_layout(total_tokens, vocab_size):
    """Pick (row_tokens, R, rows_per_block, padded_tokens).

    row_tokens tokens are flattened into one output row of C = row_tokens * V
    lanes, chosen as a multiple of 128 whenever feasible (unmasked lane-dense
    stores); rows_per_block keeps each f32 output block <= ~8 MiB so it
    double-buffers on every TPU generation."""
    V = vocab_size
    if V >= 128:
        # One token per row already spans >= 1 full vreg of lanes; a trailing
        # partial vreg (V % 128 != 0) is <1% of the row for realistic vocabs.
        row_tokens = 1
    else:
        row_tokens = 128 // math.gcd(128, V)          # C = lcm(128, V)
        if row_tokens * row_tokens * V * 4 > _MAX_EXPAND_BYTES:
            # Awkward small odd vocab: the token->lane expansion matrix would
            # be too big to keep resident; fall back to natural (tokens, V)
            # rows (partially masked stores, correctness unchanged).
            row_tokens = 1

    padded = -(-total_tokens // row_tokens) * row_tokens
    R = padded // row_tokens
    C = row_tokens * V

    if R <= 8:
        rows_per_block = R                              # full dim -> legal block
    else:
        max_rows = max(8, (_MAX_OUT_BLOCK_BYTES // (C * 4)) // 8 * 8)
        rows_per_block = min(max_rows, (R // 8) * 8)
        n_steps = pl.cdiv(R, rows_per_block)
        if n_steps % 2 == 1 and R > 16:
            # Prefer an even number of grid steps: the single "parallel" axis
            # is what v7x's two TensorCores split between them.
            tgt_rows = -(-R // (n_steps + 1))
            alt = -(-tgt_rows // 8) * 8
            if 8 <= alt <= max_rows and pl.cdiv(R, alt) % 2 == 0:
                rows_per_block = alt
    return row_tokens, R, rows_per_block, padded


def label_smoothing(targets: jax.Array, *, vocab_size: int = VOCAB_SIZE,
                    padding_idx: int = PADDING_IDX,
                    smoothing: float = SMOOTHING_PROB) -> jax.Array:
    """targets: int32 [batch, seq]  ->  float32 [batch, seq, vocab]."""
    if vocab_size <= 2:
        raise ValueError("vocab_size must be > 2 (uses smoothing / (vocab_size - 2))")
    targets = targets.astype(jnp.int32)
    B, T = targets.shape
    total = B * T
    confidence = np.float32(1.0 - smoothing)
    base = np.float32(smoothing / (vocab_size - 2))

    row_tokens, R, rows_per_block, padded = _choose_layout(total, vocab_size)
    C = row_tokens * vocab_size

    if row_tokens == 1:
        mode = "broadcast"
    elif rows_per_block >= 8:
        mode = "matmul"
    else:
        mode = "chain"          # tiny (unit-test sized) inputs only

    # --- grid-invariant patterns, built once with numpy at trace time -------
    lane = np.arange(C, dtype=np.int32)
    vocab_col = lane % np.int32(vocab_size)
    vocab_id = jnp.asarray(vocab_col.astype(np.float32)[None, :])            # (1, C)
    smooth_np = np.where(vocab_col == padding_idx, np.float32(0.0), base)
    smooth_pattern = jnp.asarray(smooth_np.astype(np.float32)[None, :])      # (1, C)

    aux_operands = []
    aux_specs = []
    if mode == "matmul":
        tok_col = lane // np.int32(vocab_size)
        expand_np = (tok_col[None, :] ==
                     np.arange(row_tokens, dtype=np.int32)[:, None])
        aux_operands.append(jnp.asarray(expand_np.astype(np.float32)))       # (row_tokens, C)
        aux_specs.append(pl.BlockSpec((row_tokens, C), lambda i: (0, 0)))
    elif mode == "chain":
        tok_col = lane // np.int32(vocab_size)
        aux_operands.append(jnp.asarray(tok_col[None, :]))                   # (1, C)
        aux_specs.append(pl.BlockSpec((1, C), lambda i: (0, 0)))

    # --- targets, flattened to (R, row_tokens) -------------------------------
    tgt_flat = targets.reshape(-1)
    if padded != total:
        # Only possible for vocab_size < 128 when B*T is not a multiple of the
        # lane granule; pad rows use padding_idx (all-zero output rows).
        tgt_flat = jnp.concatenate(
            [tgt_flat, jnp.full((padded - total,), padding_idx, jnp.int32)])
    tgt2d = tgt_flat.reshape(R, row_tokens)

    kernel = functools.partial(
        _label_smoothing_kernel,
        confidence=confidence, padding_f=np.float32(padding_idx), mode=mode)

    out2d = pl.pallas_call(
        kernel,
        out_shape=jax.ShapeDtypeStruct((R, C), jnp.float32),
        grid_spec=pltpu.PrefetchScalarGridSpec(
            num_scalar_prefetch=0,
            grid=(pl.cdiv(R, rows_per_block),),
            in_specs=[pl.BlockSpec((rows_per_block, row_tokens), lambda i: (i, 0)),
                      # Constant-pattern inputs: their block index never
                      # changes, so the pipeline fetches them once (a few KiB)
                      # and keeps them resident in VMEM for the whole grid.
                      pl.BlockSpec((1, C), lambda i: (0, 0)),
                      pl.BlockSpec((1, C), lambda i: (0, 0))] + aux_specs,
            # Lane-dense output block (C is a multiple of 128 whenever
            # feasible).  If profiling ever shows an exposed output-DMA
            # boundary on large shapes, sweep pipeline_mode=pl.Buffered(3).
            out_specs=pl.BlockSpec((rows_per_block, C), lambda i: (i, 0)),
        ),
        compiler_params=pltpu.CompilerParams(
            dimension_semantics=("parallel",),
            vmem_limit_bytes=_VMEM_LIMIT_BYTES),
    )(tgt2d, vocab_id, smooth_pattern, *aux_operands)

    out = out2d.reshape(padded, vocab_size)
    if padded != total:
        # TODO(synk): this slice re-copies the whole output through HBM; it is
        # only hit for small vocabs whose lane granule does not divide B*T
        # (never for vocab_size >= 128, never for the shapes tested here).
        out = out[:total]
    return out.reshape(B, T, vocab_size)


def _reference(targets, *, vocab_size, padding_idx, smoothing):
    confidence = 1.0 - smoothing
    probs = jnp.full(targets.shape + (vocab_size,),
                     smoothing / (vocab_size - 2), dtype=jnp.float32)
    onehot = targets[..., None] == jnp.arange(vocab_size, dtype=targets.dtype)
    probs = jnp.where(onehot, jnp.float32(confidence), probs)
    probs = probs.at[..., padding_idx].set(0.0)
    probs = jnp.where((targets == padding_idx)[..., None], 0.0, probs)
    return probs


if __name__ == "__main__":
    key = jax.random.PRNGKey(0)
    batch, seq = 2, 8
    targets = jax.random.randint(key, (batch, seq), minval=0,
                                 maxval=VOCAB_SIZE, dtype=jnp.int32)

    out = jax.block_until_ready(label_smoothing(targets))

    ref = _reference(targets, vocab_size=VOCAB_SIZE,
                     padding_idx=PADDING_IDX, smoothing=SMOOTHING_PROB)

    assert out.shape == (batch, seq, VOCAB_SIZE)
    assert out.dtype == jnp.float32
    assert jnp.allclose(out, ref, atol=1e-6), "mismatch vs reference"
    print("KERNEL_OK")
</pallas_src>

<mosaic_0001>
module attributes {stable_mosaic.version = 11 : i64} {
  func.func @_label_smoothing_kernel(%arg0: i32, %arg1: memref<2x8xi32, #tpu.memory_space<vmem>>, %arg2: memref<1x128xf32, #tpu.memory_space<vmem>>, %arg3: memref<1x128xf32, #tpu.memory_space<vmem>>, %arg4: memref<1x128xi32, #tpu.memory_space<vmem>>, %arg5: memref<2x128xf32, #tpu.memory_space<vmem>>) attributes {dimension_semantics = [#tpu.dimension_semantics<parallel>], iteration_bounds = array<i64: 1>, scalar_prefetch = 0 : i64, scratch_operands = 0 : i64, tpu.core_type = #tpu.core_type<tc>, window_params = [{transform_indices = @transform_0, window_bounds = array<i64: 2, 8>}, {pipeline_mode = #tpu.pipeline_mode<synchronous>, transform_indices = @transform_1, window_bounds = array<i64: 1, 128>}, {pipeline_mode = #tpu.pipeline_mode<synchronous>, transform_indices = @transform_2, window_bounds = array<i64: 1, 128>}, {pipeline_mode = #tpu.pipeline_mode<synchronous>, transform_indices = @transform_3, window_bounds = array<i64: 1, 128>}, {transform_indices = @transform_4, window_bounds = array<i64: 2, 128>}]} {
    %c0 = arith.constant 0 : index
    %c0_0 = arith.constant 0 : index
    %0 = vector.load %arg1[%c0, %c0_0] : memref<2x8xi32, #tpu.memory_space<vmem>>, vector<2x8xi32>
    %1 = arith.sitofp %0 : vector<2x8xi32> to vector<2x8xf32>
    %c0_1 = arith.constant 0 : index
    %c0_2 = arith.constant 0 : index
    %2 = vector.load %arg2[%c0_1, %c0_2] : memref<1x128xf32, #tpu.memory_space<vmem>>, vector<1x128xf32>
    %c0_3 = arith.constant 0 : index
    %c0_4 = arith.constant 0 : index
    %3 = vector.load %arg3[%c0_3, %c0_4] : memref<1x128xf32, #tpu.memory_space<vmem>>, vector<1x128xf32>
    %c0_5 = arith.constant 0 : index
    %c0_6 = arith.constant 0 : index
    %4 = vector.load %arg4[%c0_5, %c0_6] : memref<1x128xi32, #tpu.memory_space<vmem>>, vector<1x128xi32>
    %cst = arith.constant 0.000000e+00 : f32
    %5 = vector.broadcast %cst : f32 to vector<2x128xf32>
    %c0_i32 = arith.constant 0 : i32
    %6 = vector.broadcast %c0_i32 : i32 to vector<1x128xi32>
    %7 = arith.cmpi eq, %4, %6 : vector<1x128xi32>
    %8 = vector.extract_strided_slice %1 {offsets = [0, 0], sizes = [2, 1], strides = [1, 1]} : vector<2x8xf32> to vector<2x1xf32>
    %9 = vector.shape_cast %7 : vector<1x128xi1> to vector<1x128xi1>
    %10 = vector.broadcast %9 : vector<1x128xi1> to vector<2x128xi1>
    %11 = vector.shape_cast %8 : vector<2x1xf32> to vector<2x1xf32>
    %12 = vector.broadcast %11 : vector<2x1xf32> to vector<2x128xf32>
    %13 = arith.select %10, %12, %5 : vector<2x128xi1>, vector<2x128xf32>
    %c1_i32 = arith.constant 1 : i32
    %14 = vector.broadcast %c1_i32 : i32 to vector<1x128xi32>
    %15 = arith.cmpi eq, %4, %14 : vector<1x128xi32>
    %16 = vector.extract_strided_slice %1 {offsets = [0, 1], sizes = [2, 1], strides = [1, 1]} : vector<2x8xf32> to vector<2x1xf32>
    %17 = vector.shape_cast %15 : vector<1x128xi1> to vector<1x128xi1>
    %18 = vector.broadcast %17 : vector<1x128xi1> to vector<2x128xi1>
    %19 = vector.shape_cast %16 : vector<2x1xf32> to vector<2x1xf32>
    %20 = vector.broadcast %19 : vector<2x1xf32> to vector<2x128xf32>
    %21 = arith.select %18, %20, %13 : vector<2x128xi1>, vector<2x128xf32>
    %c2_i32 = arith.constant 2 : i32
    %22 = vector.broadcast %c2_i32 : i32 to vector<1x128xi32>
    %23 = arith.cmpi eq, %4, %22 : vector<1x128xi32>
    %24 = vector.extract_strided_slice %1 {offsets = [0, 2], sizes = [2, 1], strides = [1, 1]} : vector<2x8xf32> to vector<2x1xf32>
    %25 = vector.shape_cast %23 : vector<1x128xi1> to vector<1x128xi1>
    %26 = vector.broadcast %25 : vector<1x128xi1> to vector<2x128xi1>
    %27 = vector.shape_cast %24 : vector<2x1xf32> to vector<2x1xf32>
    %28 = vector.broadcast %27 : vector<2x1xf32> to vector<2x128xf32>
    %29 = arith.select %26, %28, %21 : vector<2x128xi1>, vector<2x128xf32>
    %c3_i32 = arith.constant 3 : i32
    %30 = vector.broadcast %c3_i32 : i32 to vector<1x128xi32>
    %31 = arith.cmpi eq, %4, %30 : vector<1x128xi32>
    %32 = vector.extract_strided_slice %1 {offsets = [0, 3], sizes = [2, 1], strides = [1, 1]} : vector<2x8xf32> to vector<2x1xf32>
    %33 = vector.shape_cast %31 : vector<1x128xi1> to vector<1x128xi1>
    %34 = vector.broadcast %33 : vector<1x128xi1> to vector<2x128xi1>
    %35 = vector.shape_cast %32 : vector<2x1xf32> to vector<2x1xf32>
    %36 = vector.broadcast %35 : vector<2x1xf32> to vector<2x128xf32>
    %37 = arith.select %34, %36, %29 : vector<2x128xi1>, vector<2x128xf32>
    %c4_i32 = arith.constant 4 : i32
    %38 = vector.broadcast %c4_i32 : i32 to vector<1x128xi32>
    %39 = arith.cmpi eq, %4, %38 : vector<1x128xi32>
    %40 = vector.extract_strided_slice %1 {offsets = [0, 4], sizes = [2, 1], strides = [1, 1]} : vector<2x8xf32> to vector<2x1xf32>
    %41 = vector.shape_cast %39 : vector<1x128xi1> to vector<1x128xi1>
    %42 = vector.broadcast %41 : vector<1x128xi1> to vector<2x128xi1>
    %43 = vector.shape_cast %40 : vector<2x1xf32> to vector<2x1xf32>
    %44 = vector.broadcast %43 : vector<2x1xf32> to vector<2x128xf32>
    %45 = arith.select %42, %44, %37 : vector<2x128xi1>, vector<2x128xf32>
    %c5_i32 = arith.constant 5 : i32
    %46 = vector.broadcast %c5_i32 : i32 to vector<1x128xi32>
    %47 = arith.cmpi eq, %4, %46 : vector<1x128xi32>
    %48 = vector.extract_strided_slice %1 {offsets = [0, 5], sizes = [2, 1], strides = [1, 1]} : vector<2x8xf32> to vector<2x1xf32>
    %49 = vector.shape_cast %47 : vector<1x128xi1> to vector<1x128xi1>
    %50 = vector.broadcast %49 : vector<1x128xi1> to vector<2x128xi1>
    %51 = vector.shape_cast %48 : vector<2x1xf32> to vector<2x1xf32>
    %52 = vector.broadcast %51 : vector<2x1xf32> to vector<2x128xf32>
    %53 = arith.select %50, %52, %45 : vector<2x128xi1>, vector<2x128xf32>
    %c6_i32 = arith.constant 6 : i32
    %54 = vector.broadcast %c6_i32 : i32 to vector<1x128xi32>
    %55 = arith.cmpi eq, %4, %54 : vector<1x128xi32>
    %56 = vector.extract_strided_slice %1 {offsets = [0, 6], sizes = [2, 1], strides = [1, 1]} : vector<2x8xf32> to vector<2x1xf32>
    %57 = vector.shape_cast %55 : vector<1x128xi1> to vector<1x128xi1>
    %58 = vector.broadcast %57 : vector<1x128xi1> to vector<2x128xi1>
    %59 = vector.shape_cast %56 : vector<2x1xf32> to vector<2x1xf32>
    %60 = vector.broadcast %59 : vector<2x1xf32> to vector<2x128xf32>
    %61 = arith.select %58, %60, %53 : vector<2x128xi1>, vector<2x128xf32>
    %c7_i32 = arith.constant 7 : i32
    %62 = vector.broadcast %c7_i32 : i32 to vector<1x128xi32>
    %63 = arith.cmpi eq, %4, %62 : vector<1x128xi32>
    %64 = vector.extract_strided_slice %1 {offsets = [0, 7], sizes = [2, 1], strides = [1, 1]} : vector<2x8xf32> to vector<2x1xf32>
    %65 = vector.shape_cast %63 : vector<1x128xi1> to vector<1x128xi1>
    %66 = vector.broadcast %65 : vector<1x128xi1> to vector<2x128xi1>
    %67 = vector.shape_cast %64 : vector<2x1xf32> to vector<2x1xf32>
    %68 = vector.broadcast %67 : vector<2x1xf32> to vector<2x128xf32>
    %69 = arith.select %66, %68, %61 : vector<2x128xi1>, vector<2x128xf32>
    %70 = vector.broadcast %2 : vector<1x128xf32> to vector<2x128xf32>
    %71 = arith.cmpf oeq, %70, %69 : vector<2x128xf32>
    %cst_7 = arith.constant 0.899999976 : f32
    %72 = vector.broadcast %cst_7 : f32 to vector<2x128xf32>
    %73 = vector.shape_cast %3 : vector<1x128xf32> to vector<1x128xf32>
    %74 = vector.broadcast %73 : vector<1x128xf32> to vector<2x128xf32>
    %75 = arith.select %71, %72, %74 : vector<2x128xi1>, vector<2x128xf32>
    %cst_8 = arith.constant 0.000000e+00 : f32
    %76 = vector.broadcast %cst_8 : f32 to vector<2x128xf32>
    %77 = arith.cmpf oeq, %69, %76 : vector<2x128xf32>
    %cst_9 = arith.constant 0.000000e+00 : f32
    %78 = vector.broadcast %cst_9 : f32 to vector<2x128xf32>
    %79 = arith.select %77, %78, %75 : vector<2x128xi1>, vector<2x128xf32>
    %c0_10 = arith.constant 0 : index
    %c0_11 = arith.constant 0 : index
    %80 = vector.load %arg5[%c0_10, %c0_11] : memref<2x128xf32, #tpu.memory_space<vmem>>, vector<2x128xf32>
    tpu.vector_store %arg5[%c0_10, %c0_11], %79 {strides = array<i32>} : memref<2x128xf32, #tpu.memory_space<vmem>>, vector<2x128xf32>,
    return
  }
  func.func @transform_0(%arg0: i32) -> (i32, i32) {
    %c0_i32 = arith.constant 0 : i32
    %c0_i32_0 = arith.constant 0 : i32
    return %arg0, %c0_i32 : i32, i32
  }
  func.func @transform_1(%arg0: i32) -> (i32, i32) {
    %c0_i32 = arith.constant 0 : i32
    %c0_i32_0 = arith.constant 0 : i32
    %c0_i32_1 = arith.constant 0 : i32
    return %c0_i32, %c0_i32_0 : i32, i32
  }
  func.func @transform_2(%arg0: i32) -> (i32, i32) {
    %c0_i32 = arith.constant 0 : i32
    %c0_i32_0 = arith.constant 0 : i32
    %c0_i32_1 = arith.constant 0 : i32
    return %c0_i32, %c0_i32_0 : i32, i32
  }
  func.func @transform_3(%arg0: i32) -> (i32, i32) {
    %c0_i32 = arith.constant 0 : i32
    %c0_i32_0 = arith.constant 0 : i32
    %c0_i32_1 = arith.constant 0 : i32
    return %c0_i32, %c0_i32_0 : i32, i32
  }
  func.func @transform_4(%arg0: i32) -> (i32, i32) {
    %c0_i32 = arith.constant 0 : i32
    %c0_i32_0 = arith.constant 0 : i32
    return %arg0, %c0_i32 : i32, i32
  }
}

</mosaic_0001>

<llo_original>
// kernel: tpu_custom_call.1
$region0: #{tpu_custom_call.1}
  #allocation0 [shape = 'u32[]', space=smem, size = 0x4, offset = 0x4, fixed_abs, tag = 'smem constant byte address 0x4 - core index']
  #allocation1 [shape = 'u32[144,128]{1,0:T(1,128)}', space=vmem, size = 0x12000, scoped, tag = 'internal scratch']
  %s0 = inlined_call_operand.hbm [shape: s32[2,8], index: 0, kind: input, shape index: {}]
  %s1 = inlined_call_operand.vmem [shape: f32[1,128], index: 1, kind: input, shape index: {}]
  %s2 = inlined_call_operand.vmem [shape: f32[1,128], index: 2, kind: input, shape index: {}]
  %s3 = inlined_call_operand.vmem [shape: s32[1,128], index: 3, kind: input, shape index: {}]
  %s4 = inlined_call_operand.hbm [shape: f32[2,128], index: 4, kind: output, shape index: {}]
  %s5 = sld [smem:[#allocation0]]
  $region30: #{tpu_custom_call.1} parent=0
    _
  %s7 = ssub.s32 1, %s5
  %s8 = scalar_select 0, %s7, %s5
  $region1: #{tpu_custom_call.1} parent=0
    #allocation2 [shape = 'u8[1024]{0}', space=vmem, size = 0x400, scoped, tag = 'input window, operand 0, single buffered']
    #allocation3 [shape = 's32[1]{0}', space=sflag, size = 0x4, scoped, tag = 'scoped memory for tpu_custom_call.1']
    #allocation4 [shape = 's32[1]{0}', space=sflag, size = 0x4, scoped, tag = 'scoped memory for tpu_custom_call.1']
    #allocation5 [shape = 'u8[1024]{0}', space=vmem, size = 0x400, scoped, tag = 'output window, operand 0, single buffered']
    %9 = vsyncpa [#allocation3], 0
    %10 = vsyncpa [#allocation4], 0
    // Predicated region
    $region2: #{tpu_custom_call.1} parent=1 // pred_check
      _
    $region3: #{tpu_custom_call.1} parent=1 // pred_check_branch
      %12 = sbr.rel (0) target = $region5
    $region4: #{tpu_custom_call.1} parent=1 // pred_region
      %s14 = ssub.s32 32, 32
      %15 = vsyncadd [#allocation3], %s14
      %s17 = sshll.u32 [#allocation2], 4
      %s18 = int_to_ptr.vmem [resolvable:$true] %s17
      %20 = dma.hbm_to_vmem [thread:$0]  %s0, 32, %s18, [#allocation3]
    $region5: #{tpu_custom_call.1} parent=1 // pred_fallthru
      _
    // Predicated region
    $region6: #{tpu_custom_call.1} parent=1 // pred_check
      _
    $region7: #{tpu_custom_call.1} parent=1 // pred_check_branch
      %22 = sbr.rel (0) target = $region9
    $region8: #{tpu_custom_call.1} parent=1 // pred_region
      _
    $region9: #{tpu_custom_call.1} parent=1 // pred_fallthru
      _
    // Predicated region
    $region10: #{tpu_custom_call.1} parent=1 // pred_check
      _
    $region11: #{tpu_custom_call.1} parent=1 // pred_check_branch
      %24 = sbr.rel (0) target = $region13
    $region12: #{tpu_custom_call.1} parent=1 // pred_region
      _
    $region13: #{tpu_custom_call.1} parent=1 // pred_fallthru
      _
    // Predicated region
    $region14: #{tpu_custom_call.1} parent=1 // pred_check
      _
    $region15: #{tpu_custom_call.1} parent=1 // pred_check_branch
      %26 = sbr.rel (0) target = $region17
    $region16: #{tpu_custom_call.1} parent=1 // pred_region
      _
    $region17: #{tpu_custom_call.1} parent=1 // pred_fallthru
      _
    // Predicated region
    $region18: #{tpu_custom_call.1} parent=1 // pred_check
      _
    $region19: #{tpu_custom_call.1} parent=1 // pred_check_branch
      %28 = sbr.rel (0) target = $region21
    $region20: #{tpu_custom_call.1} parent=1 // pred_region
      %29 = dma.done [#allocation3], 32
    $region21: #{tpu_custom_call.1} parent=1 // pred_fallthru
      _
    %v30 = vld [vmem:[#allocation2] sm:$0x3]
    %v31 = vcvt.s32.f32 %v30
    %v32 = vld [vmem:[%s1] sm:$0x1]
    %v33 = vld [vmem:[%s2] sm:$0x1]
    %v34 = vld [vmem:[%s3] sm:$0x1]
    %vm35 = vcmp.eq.s32.totalorder %v34, 0
    %v36 = vsel %vm35, 1, 0
    %v37 = vlaneseq
    %v38 = vshrl.u32 %v37, 7
    %v39 = vsub.s32 0, %v38
    %v40 = vrot.slane %v36, %v39
    %vm41 = vcmp.eq.s32.totalorder %v40, 1
    %43 = vset.pattern.permute.xlu0 0
    %44 = vperm.xlu0 %43, %v31
    %v45 = vpop.permute.xlu0 %44
    %v47 = vsel %vm41, %v45, 0.0
    %vm48 = vcmp.eq.s32.totalorder %v34, 1
    %v49 = vsel %vm48, 1, 0
    %v50 = vlaneseq
    %v51 = vshrl.u32 %v50, 7
    %v52 = vsub.s32 0, %v51
    %v53 = vrot.slane %v49, %v52
    %vm54 = vcmp.eq.s32.totalorder %v53, 1
    %55 = vset.pattern.permute.xlu0 1
    %56 = vperm.xlu0 %55, %v31
    %v57 = vpop.permute.xlu0 %56
    %v59 = vsel %vm54, %v57, %v47
    %vm60 = vcmp.eq.s32.totalorder %v34, 2
    %v61 = vsel %vm60, 1, 0
    %v62 = vlaneseq
    %v63 = vshrl.u32 %v62, 7
    %v64 = vsub.s32 0, %v63
    %v65 = vrot.slane %v61, %v64
    %vm66 = vcmp.eq.s32.totalorder %v65, 1
    %67 = vset.pattern.permute.xlu0 2
    %68 = vperm.xlu0 %67, %v31
    %v69 = vpop.permute.xlu0 %68
    %v71 = vsel %vm66, %v69, %v59
    %vm72 = vcmp.eq.s32.totalorder %v34, 3
    %v73 = vsel %vm72, 1, 0
    %v74 = vlaneseq
    %v75 = vshrl.u32 %v74, 7
    %v76 = vsub.s32 0, %v75
    %v77 = vrot.slane %v73, %v76
    %vm78 = vcmp.eq.s32.totalorder %v77, 1
    %79 = vset.pattern.permute.xlu0 3
    %80 = vperm.xlu0 %79, %v31
    %v81 = vpop.permute.xlu0 %80
    %v83 = vsel %vm78, %v81, %v71
    %vm84 = vcmp.eq.s32.totalorder %v34, 4
    %v85 = vsel %vm84, 1, 0
    %v86 = vlaneseq
    %v87 = vshrl.u32 %v86, 7
    %v88 = vsub.s32 0, %v87
    %v89 = vrot.slane %v85, %v88
    %vm90 = vcmp.eq.s32.totalorder %v89, 1
    %91 = vset.pattern.permute.xlu0 4
    %92 = vperm.xlu0 %91, %v31
    %v93 = vpop.permute.xlu0 %92
    %v95 = vsel %vm90, %v93, %v83
    %vm96 = vcmp.eq.s32.totalorder %v34, 5
    %v97 = vsel %vm96, 1, 0
    %v98 = vlaneseq
    %v99 = vshrl.u32 %v98, 7
    %v100 = vsub.s32 0, %v99
    %v101 = vrot.slane %v97, %v100
    %vm102 = vcmp.eq.s32.totalorder %v101, 1
    %103 = vset.pattern.permute.xlu0 5
    %104 = vperm.xlu0 %103, %v31
    %v105 = vpop.permute.xlu0 %104
    %v107 = vsel %vm102, %v105, %v95
    %vm108 = vcmp.eq.s32.totalorder %v34, 6
    %v109 = vsel %vm108, 1, 0
    %v110 = vlaneseq
    %v111 = vshrl.u32 %v110, 7
    %v112 = vsub.s32 0, %v111
    %v113 = vrot.slane %v109, %v112
    %vm114 = vcmp.eq.s32.totalorder %v113, 1
    %115 = vset.pattern.permute.xlu0 6
    %116 = vperm.xlu0 %115, %v31
    %v117 = vpop.permute.xlu0 %116
    %v119 = vsel %vm114, %v117, %v107
    %vm120 = vcmp.eq.s32.totalorder %v34, 7
    %v121 = vsel %vm120, 1, 0
    %v122 = vlaneseq
    %v123 = vshrl.u32 %v122, 7
    %v124 = vsub.s32 0, %v123
    %v125 = vrot.slane %v121, %v124
    %vm126 = vcmp.eq.s32.totalorder %v125, 1
    %127 = vset.pattern.permute.xlu0 7
    %128 = vperm.xlu0 %127, %v31
    %v129 = vpop.permute.xlu0 %128
    %v131 = vsel %vm126, %v129, %v119
    %v133 = vlaneseq
    %v134 = vshrl.u32 %v133, 7
    %v135 = vsub.s32 0, %v134
    %v136 = vrot.slane %v32, %v135
    %vm138 = vcmp.eq.f32.partialorder %v136, %v131
    %v140 = vlaneseq
    %v141 = vshrl.u32 %v140, 7
    %v142 = vsub.s32 0, %v141
    %v143 = vrot.slane %v33, %v142
    %v145 = vsel %vm138, 0.9, %v143
    %vm146 = vcmp.eq.f32.partialorder %v131, 0.0
    %v147 = vsel %vm146, 0.0, %v145
    %148 = vst [vmem:[#allocation5] sm:$0x3] %v147
    // Predicated region
    $region22: #{tpu_custom_call.1} parent=1 // pred_check
      _
    $region23: #{tpu_custom_call.1} parent=1 // pred_check_branch
      %150 = sbr.rel (0) target = $region25
    $region24: #{tpu_custom_call.1} parent=1 // pred_region
      %s152 = ssub.s32 32, 32
      %153 = vsyncadd [#allocation4], %s152
      %s155 = sshll.u32 [#allocation5], 4
      %s156 = int_to_ptr.vmem [resolvable:$true] %s155
      %158 = dma.vmem_to_hbm [thread:$0]  %s156, 32, %s4, [#allocation4]
    $region25: #{tpu_custom_call.1} parent=1 // pred_fallthru
      _
    // Predicated region
    $region26: #{tpu_custom_call.1} parent=1 // pred_check
      _
    $region27: #{tpu_custom_call.1} parent=1 // pred_check_branch
      %160 = sbr.rel (0) target = $region29
    $region28: #{tpu_custom_call.1} parent=1 // pred_region
      %161 = dma.done [#allocation4], 32
    $region29: #{tpu_custom_call.1} parent=1 // pred_fallthru
      _
    %162 = vsyncpa [#allocation3], 1
    %163 = vsyncpa [#allocation4], 1

</llo_original>
